<compile_context>
chip_gen: v7x
topology: tpu7x:2x2x1
jax: 0.10.0
libtpu: 0.0.40
codegen_flags: <defaults>
</compile_context>

<pallas_src>
import functools
import math

import numpy as np

import jax
import jax.numpy as jnp
from jax import lax
from jax.experimental import pallas as pl
from jax.experimental.pallas import tpu as pltpu


def _round_up(x: int, m: int) -> int:
    return ((x + m - 1) // m) * m


# ---------------------------------------------------------------------------
# Fused kernel: normalize (layer 0) + n_layers x (EqualizedLinear + LeakyReLU)
# Grid = (net in {c,s}, row tile, layer); activation carried across layers in VMEM.
# ---------------------------------------------------------------------------
def _mapping_mlp_kernel(x_ref, mask_ref, w_ref, b_ref, out_ref, act_ref, *, eps, slope):
    """Refs:
      x_ref:    (tile_m, Fp)      raw z rows (pre-normalization), f32
      mask_ref: (tile_m, tile_m)  same-style-group indicator (0/1), f32, VMEM-resident
      w_ref:    (L, Fp, Fp)       this net's weights, (in, out) layout, equalized-lr scale
                                  folded in, bf16, VMEM-resident across all row tiles
      b_ref:    (L, 1, Fp)        this net's biases, f32, VMEM-resident
      out_ref:  (tile_m, Fp)      output rows for this (net, row tile)
      act_ref:  (tile_m, Fp) f32  activation carried across the layer grid axis
    """
    layer = pl.program_id(2)

    @pl.when(layer == 0)
    def _():
        # Fused F.normalize(z, dim=1): L2 norm over each style group of N consecutive rows.
        # Group sum-of-squares via a 0/1 mask matmul. HIGHEST keeps it ~f32-exact and it
        # only runs once per row tile, so the multi-pass MXU cost is negligible.
        x = x_ref[...].astype(jnp.float32)
        ssq = jnp.dot(mask_ref[...], x * x,
                      precision=lax.Precision.HIGHEST,
                      preferred_element_type=jnp.float32)
        act_ref[...] = x / jnp.maximum(jnp.sqrt(ssq), eps)

    # EqualizedLinear + LeakyReLU(0.2): bf16 operands on the MXU (single pass), f32
    # accumulate, f32 epilogue (bias add + select stay f32 -> native on v5e VPU too).
    x = act_ref[...]
    w = w_ref[layer]                                           # (Fp, Fp) bf16, c pre-folded
    y = jnp.dot(x.astype(jnp.bfloat16), w, preferred_element_type=jnp.float32)
    y = y + b_ref[layer]                                       # (1, Fp) f32 broadcast
    y = jnp.where(y >= 0.0, y, slope * y)                      # LeakyReLU(0.2)
    act_ref[...] = y

    @pl.when(layer == pl.num_programs(2) - 1)
    def _():
        out_ref[...] = y.astype(out_ref.dtype)


# ---------------------------------------------------------------------------
# Module forward
# ---------------------------------------------------------------------------
def mapping_network_cs_pyramid(z, w_c, b_c, w_s, b_s, *, negative_slope=0.2, eps=1e-12):
    """Forward of MappingNetwork_cs_pyramid.  z: [B, n_styles, F] -> (c, s) both [B, n_styles, F]."""
    B, N, F = z.shape
    L, Fout, Fin = w_c.shape
    assert (Fout, Fin) == (F, F) and w_s.shape == w_c.shape
    assert b_c.shape == (L, F) and b_s.shape == (L, F)

    # ---- one-time parameter prep (XLA side) --------------------------------------
    # Fold the equalized-lr scale c = 1/sqrt(F) into the weights, transpose to (in, out)
    # so the kernel contracts the lane dim of x with the leading dim of W (no per-step
    # transposed-operand lowering), and cast to bf16 for the single-pass MXU path.
    c = 1.0 / math.sqrt(float(F))
    def prep(w):                                   # (L, out, in) -> (L, in, out) bf16
        return (jnp.transpose(w, (0, 2, 1)).astype(jnp.float32) * c).astype(jnp.bfloat16)
    w_all = jnp.stack([prep(w_c), prep(w_s)], axis=0)                        # (2, L, F, F)
    b_all = jnp.stack([b_c, b_s], axis=0).astype(jnp.float32)[:, :, None, :]  # (2, L, 1, F)

    # ---- padding to lane/sublane-friendly shapes ----------------------------------
    Fp = _round_up(max(F, 128), 128)               # lane-dense vregs / unmasked stores
    M = B * N
    unit = (N * 8) // math.gcd(N, 8)               # row tile must hold whole style groups
    tile_m = min(_round_up(M, unit), max(unit, (256 // unit) * unit))
    M_pad = _round_up(M, tile_m)

    x = z.reshape(M, F).astype(jnp.float32)
    x = jnp.pad(x, ((0, M_pad - M), (0, Fp - F)))
    w_all = jnp.pad(w_all, ((0, 0), (0, 0), (0, Fp - F), (0, Fp - F)))
    b_all = jnp.pad(b_all, ((0, 0), (0, 0), (0, 0), (0, Fp - F)))

    # Same-style-group indicator for the fused normalize (trace-time constant).
    gid = np.arange(tile_m) // N
    mask = jnp.asarray((gid[:, None] == gid[None, :]).astype(np.float32))

    grid = (2, M_pad // tile_m, L)                 # (net, row tile, layer)
    kernel = functools.partial(_mapping_mlp_kernel, eps=eps, slope=negative_slope)
    out = pl.pallas_call(
        kernel,
        out_shape=jax.ShapeDtypeStruct((2, M_pad, Fp), z.dtype),
        grid_spec=pltpu.PrefetchScalarGridSpec(
            num_scalar_prefetch=0,
            grid=grid,
            in_specs=[
                pl.BlockSpec((tile_m, Fp), lambda n, m, l: (m, 0)),             # z rows
                pl.BlockSpec((tile_m, tile_m), lambda n, m, l: (0, 0)),         # group mask
                pl.BlockSpec((None, L, Fp, Fp), lambda n, m, l: (n, 0, 0, 0)),  # weights (resident)
                pl.BlockSpec((None, L, 1, Fp), lambda n, m, l: (n, 0, 0, 0)),   # biases (resident)
            ],
            out_specs=pl.BlockSpec((None, tile_m, Fp), lambda n, m, l: (n, m, 0)),
            scratch_shapes=[pltpu.VMEM((tile_m, Fp), jnp.float32)],             # carried act
        ),
        compiler_params=pltpu.CompilerParams(
            dimension_semantics=("parallel", "parallel", "arbitrary")),
    )(x, mask, w_all, b_all)

    c_out = out[0, :M, :F].reshape(B, N, F)
    s_out = out[1, :M, :F].reshape(B, N, F)
    return c_out, s_out


# ---------------------------------------------------------------------------
# References
# ---------------------------------------------------------------------------
def _reference_forward(z, w_c, b_c, w_s, b_s, *, coarse_ind=3, middle_ind=7,
                       negative_slope=0.2, eps=1e-12):
    """Literal PyTorch semantics: split along dim=1, per-slice nets, concat.  Full f32."""
    norm = jnp.sqrt(jnp.sum(z * z, axis=1, keepdims=True))
    z_n = z / jnp.maximum(norm, eps)
    c = 1.0 / math.sqrt(float(z.shape[-1]))

    def net(x, w_stack, b_stack):
        for l in range(w_stack.shape[0]):
            x = jnp.matmul(x, (w_stack[l] * c).T,
                           precision=lax.Precision.HIGHEST) + b_stack[l]
            x = jnp.where(x >= 0.0, x, negative_slope * x)
        return x

    levels = [(0, coarse_ind), (coarse_ind, middle_ind), (middle_ind, z.shape[1])]
    c_parts = [net(z_n[:, s:e, :], w_c, b_c) for s, e in levels]
    s_parts = [net(z_n[:, s:e, :], w_s, b_s) for s, e in levels]
    return jnp.concatenate(c_parts, axis=1), jnp.concatenate(s_parts, axis=1)


def _matched_reference(z, w_c, b_c, w_s, b_s, *, negative_slope=0.2, eps=1e-12):
    """Mirror of the kernel's arithmetic (f32 normalize, bf16 weights/acts on the MXU,
    f32 accumulate + epilogue) to validate kernel structure at tight tolerance."""
    B, N, F = z.shape
    norm = jnp.sqrt(jnp.sum(z * z, axis=1, keepdims=True))
    x = (z / jnp.maximum(norm, eps)).reshape(B * N, F).astype(jnp.float32)
    c = 1.0 / math.sqrt(float(F))

    def net(x, w_stack, b_stack):
        for l in range(w_stack.shape[0]):
            wl = (w_stack[l].T.astype(jnp.float32) * c).astype(jnp.bfloat16)
            y = jnp.dot(x.astype(jnp.bfloat16), wl,
                        preferred_element_type=jnp.float32) + b_stack[l]
            x = jnp.where(y >= 0.0, y, negative_slope * y)
        return x

    return (net(x, w_c, b_c).reshape(B, N, F), net(x, w_s, b_s).reshape(B, N, F))


if __name__ == "__main__":
    key = jax.random.PRNGKey(0)
    B, N_STYLES, FEATURES, N_LAYERS = 2, 8, 32, 2
    k1, k2, k3, k4, k5 = jax.random.split(key, 5)

    z = jax.random.normal(k1, (B, N_STYLES, FEATURES), dtype=jnp.float32)
    # Weights ~ N(0,1) (EqualizedWeight); biases default to 0.0 in the module but are made
    # nonzero here so the bias path is actually exercised.
    w_c = jax.random.normal(k2, (N_LAYERS, FEATURES, FEATURES), dtype=jnp.float32)
    w_s = jax.random.normal(k3, (N_LAYERS, FEATURES, FEATURES), dtype=jnp.float32)
    b_c = 0.1 * jax.random.normal(k4, (N_LAYERS, FEATURES), dtype=jnp.float32)
    b_s = 0.1 * jax.random.normal(k5, (N_LAYERS, FEATURES), dtype=jnp.float32)

    c_out, s_out = mapping_network_cs_pyramid(z, w_c, b_c, w_s, b_s)
    c_out = jax.block_until_ready(c_out)
    s_out = jax.block_until_ready(s_out)

    # Tight check: reference that mirrors the kernel's bf16-MXU arithmetic.
    c_m, s_m = _matched_reference(z, w_c, b_c, w_s, b_s)
    np.testing.assert_allclose(np.asarray(c_out), np.asarray(c_m), rtol=1e-3, atol=1e-3)
    np.testing.assert_allclose(np.asarray(s_out), np.asarray(s_m), rtol=1e-3, atol=1e-3)

    # Loose check: literal full-f32 PyTorch semantics (split / per-slice nets / concat).
    # Slack accounts for the intentional bf16 MXU inputs (per perf review).
    c_ref, s_ref = _reference_forward(z, w_c, b_c, w_s, b_s)
    np.testing.assert_allclose(np.asarray(c_out), np.asarray(c_ref), rtol=5e-2, atol=5e-2)
    np.testing.assert_allclose(np.asarray(s_out), np.asarray(s_ref), rtol=5e-2, atol=5e-2)

    print("KERNEL_OK")
</pallas_src>

<mosaic_0001>
module attributes {stable_mosaic.version = 11 : i64} {
  func.func @_mapping_mlp_kernel(%arg0: i32, %arg1: i32, %arg2: i32, %arg3: memref<16x128xf32, #tpu.memory_space<vmem>>, %arg4: memref<16x16xf32, #tpu.memory_space<vmem>>, %arg5: memref<1x2x128x128xbf16, #tpu.memory_space<vmem>>, %arg6: memref<1x2x1x128xf32, #tpu.memory_space<vmem>>, %arg7: memref<1x16x128xf32, #tpu.memory_space<vmem>>, %arg8: memref<16x128xf32, #tpu.memory_space<vmem>>) attributes {dimension_semantics = [#tpu.dimension_semantics<parallel>, #tpu.dimension_semantics<parallel>, #tpu.dimension_semantics<arbitrary>], iteration_bounds = array<i64: 2, 1, 2>, scalar_prefetch = 0 : i64, scratch_operands = 1 : i64, tpu.core_type = #tpu.core_type<tc>, window_params = [{transform_indices = @transform_0, window_bounds = array<i64: 16, 128>}, {pipeline_mode = #tpu.pipeline_mode<synchronous>, transform_indices = @transform_1, window_bounds = array<i64: 16, 16>}, {transform_indices = @transform_2, window_bounds = array<i64: 1, 2, 128, 128>}, {transform_indices = @transform_3, window_bounds = array<i64: 1, 2, 1, 128>}, {transform_indices = @transform_4, window_bounds = array<i64: 1, 16, 128>}]} {
    %c0_i32 = arith.constant 0 : i32
    %0 = arith.cmpi eq, %arg2, %c0_i32 : i32
    %1 = arith.extui %0 : i1 to i32
    %c0_i32_0 = arith.constant 0 : i32
    %2 = arith.cmpi ne, %1, %c0_i32_0 : i32
    scf.if %2 {
      %c0_13 = arith.constant 0 : index
      %c0_14 = arith.constant 0 : index
      %23 = vector.load %arg3[%c0_13, %c0_14] : memref<16x128xf32, #tpu.memory_space<vmem>>, vector<16x128xf32>
      %c0_15 = arith.constant 0 : index
      %c0_16 = arith.constant 0 : index
      %24 = vector.load %arg4[%c0_15, %c0_16] : memref<16x16xf32, #tpu.memory_space<vmem>>, vector<16x16xf32>
      %25 = arith.mulf %23, %23 : vector<16x128xf32>
      %cst_17 = arith.constant dense<0.000000e+00> : vector<16x128xf32>
      %26 = tpu.matmul %24, %25, %cst_17 {dimension_numbers = #tpu.dot_dimension_numbers<[1], [0], [0], [1], [0, 0, 1, 1], [], []>, precision = #tpu.contract_precision<fp32>} : vector<16x16xf32>, vector<16x128xf32>, vector<16x128xf32> -> vector<16x128xf32>
      %27 = math.sqrt %26 : vector<16x128xf32>
      %cst_18 = arith.constant 9.99999996E-13 : f32
      %28 = vector.broadcast %cst_18 : f32 to vector<16x128xf32>
      %29 = arith.maximumf %27, %28 : vector<16x128xf32>
      %30 = arith.divf %23, %29 : vector<16x128xf32>
      %c0_19 = arith.constant 0 : index
      %c0_20 = arith.constant 0 : index
      %31 = vector.load %arg8[%c0_19, %c0_20] : memref<16x128xf32, #tpu.memory_space<vmem>>, vector<16x128xf32>
      tpu.vector_store %arg8[%c0_19, %c0_20], %30 {strides = array<i32>} : memref<16x128xf32, #tpu.memory_space<vmem>>, vector<16x128xf32>,
    } else {
    }
    %c0 = arith.constant 0 : index
    %c0_1 = arith.constant 0 : index
    %3 = vector.load %arg8[%c0, %c0_1] : memref<16x128xf32, #tpu.memory_space<vmem>>, vector<16x128xf32>
    %c0_2 = arith.constant 0 : index
    %4 = arith.index_cast %arg2 : i32 to index
    %c0_3 = arith.constant 0 : index
    %c0_4 = arith.constant 0 : index
    %5 = vector.load %arg5[%c0_2, %4, %c0_3, %c0_4] : memref<1x2x128x128xbf16, #tpu.memory_space<vmem>>, vector<1x1x128x128xbf16>
    %6 = vector.shape_cast %5 : vector<1x1x128x128xbf16> to vector<128x128xbf16>
    %7 = arith.truncf %3 : vector<16x128xf32> to vector<16x128xbf16>
    %cst = arith.constant dense<0.000000e+00> : vector<16x128xf32>
    %8 = tpu.matmul %7, %6, %cst {dimension_numbers = #tpu.dot_dimension_numbers<[1], [0], [0], [1], [0, 0, 1, 1], [], []>} : vector<16x128xbf16>, vector<128x128xbf16>, vector<16x128xf32> -> vector<16x128xf32>
    %c0_5 = arith.constant 0 : index
    %9 = arith.index_cast %arg2 : i32 to index
    %c0_6 = arith.constant 0 : index
    %c0_7 = arith.constant 0 : index
    %10 = vector.load %arg6[%c0_5, %9, %c0_6, %c0_7] : memref<1x2x1x128xf32, #tpu.memory_space<vmem>>, vector<1x1x1x128xf32>
    %11 = vector.shape_cast %10 : vector<1x1x1x128xf32> to vector<1x128xf32>
    %12 = vector.broadcast %11 : vector<1x128xf32> to vector<16x128xf32>
    %13 = arith.addf %8, %12 : vector<16x128xf32>
    %cst_8 = arith.constant 0.000000e+00 : f32
    %14 = vector.broadcast %cst_8 : f32 to vector<16x128xf32>
    %15 = arith.cmpf oge, %13, %14 : vector<16x128xf32>
    %cst_9 = arith.constant 2.000000e-01 : f32
    %16 = vector.broadcast %cst_9 : f32 to vector<16x128xf32>
    %17 = arith.mulf %16, %13 : vector<16x128xf32>
    %18 = arith.select %15, %13, %17 : vector<16x128xi1>, vector<16x128xf32>
    %c0_10 = arith.constant 0 : index
    %c0_11 = arith.constant 0 : index
    %19 = vector.load %arg8[%c0_10, %c0_11] : memref<16x128xf32, #tpu.memory_space<vmem>>, vector<16x128xf32>
    tpu.vector_store %arg8[%c0_10, %c0_11], %18 {strides = array<i32>} : memref<16x128xf32, #tpu.memory_space<vmem>>, vector<16x128xf32>,
    %c1_i32 = arith.constant 1 : i32
    %20 = arith.cmpi eq, %arg2, %c1_i32 : i32
    %21 = arith.extui %20 : i1 to i32
    %c0_i32_12 = arith.constant 0 : i32
    %22 = arith.cmpi ne, %21, %c0_i32_12 : i32
    scf.if %22 {
      %c0_13 = arith.constant 0 : index
      %c0_14 = arith.constant 0 : index
      %c0_15 = arith.constant 0 : index
      %23 = vector.load %arg7[%c0_13, %c0_14, %c0_15] : memref<1x16x128xf32, #tpu.memory_space<vmem>>, vector<1x16x128xf32>
      %24 = vector.shape_cast %23 : vector<1x16x128xf32> to vector<16x128xf32>
      %25 = vector.shape_cast %18 : vector<16x128xf32> to vector<1x16x128xf32>
      tpu.vector_store %arg7[%c0_13, %c0_14, %c0_15], %25 {strides = array<i32>} : memref<1x16x128xf32, #tpu.memory_space<vmem>>, vector<1x16x128xf32>,
    } else {
    }
    return
  }
  func.func @transform_0(%arg0: i32, %arg1: i32, %arg2: i32) -> (i32, i32) {
    %c0_i32 = arith.constant 0 : i32
    %c0_i32_0 = arith.constant 0 : i32
    return %arg1, %c0_i32 : i32, i32
  }
  func.func @transform_1(%arg0: i32, %arg1: i32, %arg2: i32) -> (i32, i32) {
    %c0_i32 = arith.constant 0 : i32
    %c0_i32_0 = arith.constant 0 : i32
    %c0_i32_1 = arith.constant 0 : i32
    return %c0_i32, %c0_i32_0 : i32, i32
  }
  func.func @transform_2(%arg0: i32, %arg1: i32, %arg2: i32) -> (i32, i32, i32, i32) {
    %c0_i32 = arith.constant 0 : i32
    %c0_i32_0 = arith.constant 0 : i32
    %c0_i32_1 = arith.constant 0 : i32
    %c0_i32_2 = arith.constant 0 : i32
    return %arg0, %c0_i32, %c0_i32_0, %c0_i32_1 : i32, i32, i32, i32
  }
  func.func @transform_3(%arg0: i32, %arg1: i32, %arg2: i32) -> (i32, i32, i32, i32) {
    %c0_i32 = arith.constant 0 : i32
    %c0_i32_0 = arith.constant 0 : i32
    %c0_i32_1 = arith.constant 0 : i32
    %c0_i32_2 = arith.constant 0 : i32
    return %arg0, %c0_i32, %c0_i32_0, %c0_i32_1 : i32, i32, i32, i32
  }
  func.func @transform_4(%arg0: i32, %arg1: i32, %arg2: i32) -> (i32, i32, i32) {
    %c0_i32 = arith.constant 0 : i32
    %c0_i32_0 = arith.constant 0 : i32
    return %arg0, %arg1, %c0_i32 : i32, i32, i32
  }
}

</mosaic_0001>

<llo_original>
// kernel: tpu_custom_call.1
$region0: #{tpu_custom_call.1}
  #allocation0 [shape = 'u32[]', space=smem, size = 0x4, offset = 0x4, fixed_abs, tag = 'smem constant byte address 0x4 - core index']
  #allocation1 [shape = 'u32[144,128]{1,0:T(1,128)}', space=vmem, size = 0x12000, scoped, tag = 'internal scratch']
  #allocation2 [shape = 'f32[16,128]{1,0:T(8,128)}', space=vmem, size = 0x2000, scoped, tag = 'scratch operand']
  %s0 = inlined_call_operand.hbm [shape: f32[16,128], index: 0, kind: input, shape index: {}]
  %s1 = inlined_call_operand.hbm [shape: f32[16,16], index: 1, kind: input, shape index: {}]
  %s2 = inlined_call_operand.hbm [shape: bf16[2,2,128,128], index: 2, kind: input, shape index: {}]
  %s3 = inlined_call_operand.vmem [shape: f32[2,2,1,128], index: 3, kind: input, shape index: {}]
  %s4 = inlined_call_operand.hbm [shape: f32[2,16,128], index: 4, kind: output, shape index: {}]
  %s5 = sld [smem:[#allocation0]]
  $region69: #{tpu_custom_call.1} parent=0
    _
  %s7 = ssub.s32 1, %s5
  %s8 = scalar_select 0, %s7, %s5
  $region1: #{tpu_custom_call.1} parent=0
    #allocation3 [shape = 'u8[8192]{0}', space=vmem, size = 0x2000, scoped, tag = 'input window, operand 0, single buffered']
    #allocation4 [shape = 's32[2]{0}', space=sflag, size = 0x8, scoped, tag = 'scoped memory for tpu_custom_call.1']
    #allocation5 [shape = 's32[2]{0}', space=sflag, size = 0x8, scoped, tag = 'scoped memory for tpu_custom_call.1']
    #allocation6 [shape = 'u8[8192]{0}', space=vmem, size = 0x2000, scoped, tag = 'input window, operand 1, single buffered']
    #allocation7 [shape = 's32[1]{0}', space=sflag, size = 0x4, scoped, tag = 'scoped memory for tpu_custom_call.1']
    #allocation8 [shape = 'u8[131072]{0}', space=vmem, size = 0x20000, scoped, tag = 'input window, operand 2']
    #allocation9 [shape = 'u8[16384]{0}', space=vmem, size = 0x4000, scoped, tag = 'output window, operand 0']
    %9 = vsyncpa [#allocation4], 0
    %10 = vsyncpa [#allocation7], 0
    %11 = vsyncpa [#allocation5], 0
    %s12 = scalar_lea.sflag [#allocation5], 1
    %13 = vsyncpa %s12, 0
    loop: start=0, step=1, limit=6
    $region2: #{tpu_custom_call.1} parent=1 // loop_pre_header
      _
    $region3: #{tpu_custom_call.1} parent=1 // loop_header
      %s15 = sphi 0, %s19
      %p16 = scmp.ge.s32.totalorder %s15, 6
      %s22 = sphi 0, %s41
      %s23 = sphi 0, %s37
      %s24 = sphi 0, %s33
      %s25 = sphi 0, %s22
      %s26 = sphi 0, %s23
      %s27 = sphi 0, %s24
      %s28 = sphi 0, %s25
      %s29 = sphi 0, %s26
      %s30 = sphi 0, %s27
      %s44 = sphi 0, %s46
      %s47 = sphi 0, %s44
      %s48 = sphi 0, %s47
      %s64 = sphi 0, %s48
      %s68 = sphi 0, %s68
      %s70 = sphi 0, %s68
      %s71 = sphi 0, %s70
      %s85 = sphi 0, %s71
      %s91 = sphi 0, %s93
      %s94 = sphi 0, %s91
      %s95 = sphi 0, %s94
      %s111 = sphi 0, %s95
      %s117 = sphi 0, %s119
      %s120 = sphi 0, %s117
      %s121 = sphi 0, %s120
      %s137 = sphi 0, %s121
      %s145 = sphi 0, %s147
      %s148 = sphi 0, %s145
      %s149 = sphi 0, %s148
      %s165 = sphi 0, %s149
    $region4: #{tpu_custom_call.1} parent=1 // loop_header_branch
      %18 = sbr.rel (%p16) target = $region8
    $region5: #{tpu_custom_call.1} parent=1 // loop_body
      %s20 = ssub.s32 %s15, 1
      %s21 = ssub.s32 %s15, 2
      %s31 = sadd.s32 1, %s24
      %p32 = scmp.ge.s32.totalorder %s31, 2
      %s33 = scalar_select %p32, 0, %s31
      %s34 = sadd.s32 1, %s23
      %s35 = scalar_select %p32, %s34, %s23
      %p36 = scmp.ge.s32.totalorder %s35, 1
      %s37 = scalar_select %p36, 0, %s35
      %s38 = sadd.s32 1, %s22
      %s39 = scalar_select %p36, %s38, %s22
      %p40 = scmp.ge.s32.totalorder %s39, 2
      %s41 = scalar_select %p40, 0, %s39
      %s42 = ssub.s32 %s23, %s37
      %p43 = scmp.eq.s32.totalorder %s42, 0
      %s45 = sadd.s32 %s44, 1
      %s46 = scalar_select %p43, %s44, %s45
      %p49 = pneg %p43
      %p50 = scmp.eq.s32.totalorder %s15, 3
      %p51 = por %p49, %p50
      %p52 = scmp.ne.s32.totalorder %s44, %s47
      %p53 = scmp.eq.s32.totalorder %s15, 0
      %p54 = por %p52, %p53
      %p55 = scmp.ne.s32.totalorder %s44, %s47
      %p56 = scmp.eq.s32.totalorder %s20, 3
      %p57 = por %p55, %p56
      %p58 = scmp.ne.s32.totalorder %s47, %s48
      %p59 = scmp.eq.s32.totalorder %s20, 0
      %p60 = por %p58, %p59
      %p61 = scmp.ne.s32.totalorder %s47, %s48
      %p62 = scmp.eq.s32.totalorder %s21, 3
      %p63 = por %p61, %p62
      %p65 = scmp.ne.s32.totalorder %s48, %s64
      %p66 = scmp.eq.s32.totalorder %s21, 0
      %p67 = por %p65, %p66
      %s69 = sadd.s32 %s68, 1
      %p72 = scmp.eq.s32.totalorder %s15, 3
      %p73 = scmp.ne.s32.totalorder %s68, %s70
      %p74 = scmp.eq.s32.totalorder %s15, 0
      %p75 = por %p73, %p74
      %p76 = scmp.ne.s32.totalorder %s68, %s70
      %p77 = scmp.eq.s32.totalorder %s20, 3
      %p78 = por %p76, %p77
      %p79 = scmp.ne.s32.totalorder %s70, %s71
      %p80 = scmp.eq.s32.totalorder %s20, 0
      %p81 = por %p79, %p80
      %p82 = scmp.ne.s32.totalorder %s70, %s71
      %p83 = scmp.eq.s32.totalorder %s21, 3
      %p84 = por %p82, %p83
      %p86 = scmp.ne.s32.totalorder %s71, %s85
      %p87 = scmp.eq.s32.totalorder %s21, 0
      %p88 = por %p86, %p87
      %s89 = ssub.s32 %s22, %s41
      %p90 = scmp.eq.s32.totalorder %s89, 0
      %s92 = sadd.s32 %s91, 1
      %s93 = scalar_select %p90, %s91, %s92
      %p96 = pneg %p90
      %p97 = scmp.eq.s32.totalorder %s15, 3
      %p98 = por %p96, %p97
      %p99 = scmp.ne.s32.totalorder %s91, %s94
      %p100 = scmp.eq.s32.totalorder %s15, 0
      %p101 = por %p99, %p100
      %p102 = scmp.ne.s32.totalorder %s91, %s94
      %p103 = scmp.eq.s32.totalorder %s20, 3
      %p104 = por %p102, %p103
      %p105 = scmp.ne.s32.totalorder %s94, %s95
      %p106 = scmp.eq.s32.totalorder %s20, 0
      %p107 = por %p105, %p106
      %p108 = scmp.ne.s32.totalorder %s94, %s95
      %p109 = scmp.eq.s32.totalorder %s21, 3
      %p110 = por %p108, %p109
      %p112 = scmp.ne.s32.totalorder %s95, %s111
      %p113 = scmp.eq.s32.totalorder %s21, 0
      %p114 = por %p112, %p113
      %s115 = ssub.s32 %s22, %s41
      %p116 = scmp.eq.s32.totalorder %s115, 0
      %s118 = sadd.s32 %s117, 1
      %s119 = scalar_select %p116, %s117, %s118
      %p122 = pneg %p116
      %p123 = scmp.eq.s32.totalorder %s15, 3
      %p124 = por %p122, %p123
      %p125 = scmp.ne.s32.totalorder %s117, %s120
      %p126 = scmp.eq.s32.totalorder %s15, 0
      %p127 = por %p125, %p126
      %p128 = scmp.ne.s32.totalorder %s117, %s120
      %p129 = scmp.eq.s32.totalorder %s20, 3
      %p130 = por %p128, %p129
      %p131 = scmp.ne.s32.totalorder %s120, %s121
      %p132 = scmp.eq.s32.totalorder %s20, 0
      %p133 = por %p131, %p132
      %p134 = scmp.ne.s32.totalorder %s120, %s121
      %p135 = scmp.eq.s32.totalorder %s21, 3
      %p136 = por %p134, %p135
      %p138 = scmp.ne.s32.totalorder %s121, %s137
      %p139 = scmp.eq.s32.totalorder %s21, 0
      %p140 = por %p138, %p139
      %s141 = ssub.s32 %s22, %s41
      %s142 = ssub.s32 %s23, %s37
      %s143 = sor.u32 %s141, %s142
      %p144 = scmp.eq.s32.totalorder %s143, 0
      %s146 = sadd.s32 %s145, 1
      %s147 = scalar_select %p144, %s145, %s146
      %p150 = pneg %p144
      %p151 = scmp.eq.s32.totalorder %s15, 3
      %p152 = por %p150, %p151
      %p153 = scmp.ne.s32.totalorder %s145, %s148
      %p154 = scmp.eq.s32.totalorder %s15, 0
      %p155 = por %p153, %p154
      %p156 = scmp.ne.s32.totalorder %s145, %s148
      %p157 = scmp.eq.s32.totalorder %s20, 3
      %p158 = por %p156, %p157
      %p159 = scmp.ne.s32.totalorder %s148, %s149
      %p160 = scmp.eq.s32.totalorder %s20, 0
      %p161 = por %p159, %p160
      %p162 = scmp.ne.s32.totalorder %s148, %s149
      %p163 = scmp.eq.s32.totalorder %s21, 3
      %p164 = por %p162, %p163
      %p166 = scmp.ne.s32.totalorder %s149, %s165
      %p167 = scmp.eq.s32.totalorder %s21, 0
      %p168 = por %p166, %p167
      %p169 = scmp.le.s32.totalorder 1, %s15
      %p170 = scmp.lt.s32.totalorder %s15, 5
      %p171 = pnand %p169, %p170
      %p172 = pneg %p171
      // Predicated region
      $region9: #{tpu_custom_call.1} parent=5 // pred_check
        _
      $region10: #{tpu_custom_call.1} parent=5 // pred_check_branch
        %174 = sbr.rel (%p171) target = $region12
      $region11: #{tpu_custom_call.1} parent=5 // pred_region
        %s175 = ssub.s32 %s15, 1
        // Predicated region
        $region13: #{tpu_custom_call.1} parent=11 // pred_check
          %p176 = pneg %p60
        $region14: #{tpu_custom_call.1} parent=11 // pred_check_branch
          %178 = sbr.rel (%p176) target = $region16
        $region15: #{tpu_custom_call.1} parent=11 // pred_region
          %s179 = smul.u32 2, %s26
          %s181 = ssub.s32 256, 256
          %182 = vsyncadd [#allocation4], %s181
          %s183 = smul.addr %s179, 128
          %s184 = scalar_lea.hbm %s0, %s183
          %s185 = sshll.u32 [#allocation3], 4
          %s186 = int_to_ptr.vmem [resolvable:$true] %s185
          %191 = dma.hbm_to_vmem [thread:$0]  %s184, 256, %s186, [#allocation4], 128, 128, 8
        $region16: #{tpu_custom_call.1} parent=11 // pred_fallthru
          _
        // Predicated region
        $region17: #{tpu_custom_call.1} parent=11 // pred_check
          %p192 = pneg %p81
        $region18: #{tpu_custom_call.1} parent=11 // pred_check_branch
          %194 = sbr.rel (%p192) target = $region20
        $region19: #{tpu_custom_call.1} parent=11 // pred_region
          %s196 = ssub.s32 256, 256
          %197 = vsyncadd [#allocation7], %s196
          %s198 = sshll.u32 [#allocation6], 4
          %s199 = int_to_ptr.vmem [resolvable:$true] %s198
          %204 = dma.hbm_to_vmem [thread:$0]  %s1, 256, %s199, [#allocation7], 128, 128, 8
        $region20: #{tpu_custom_call.1} parent=11 // pred_fallthru
          _
      $region12: #{tpu_custom_call.1} parent=5 // pred_fallthru
        _
      %p205 = scmp.lt.s32.totalorder %s15, 4
      // Predicated region
      $region21: #{tpu_custom_call.1} parent=5 // pred_check
        %p206 = pneg %p205
      $region22: #{tpu_custom_call.1} parent=5 // pred_check_branch
        %208 = sbr.rel (%p206) target = $region24
      $region23: #{tpu_custom_call.1} parent=5 // pred_region
        // Predicated region
        $region25: #{tpu_custom_call.1} parent=23 // pred_check
          %p209 = pneg %p101
        $region26: #{tpu_custom_call.1} parent=23 // pred_check_branch
          %211 = sbr.rel (%p209) target = $region28
        $region27: #{tpu_custom_call.1} parent=23 // pred_region
          %s212 = sand.u32 %s15, 1
          %s213 = scalar_lea.sflag [#allocation4], %s212
          %s214 = sand.u32 %s91, 1
          %s215 = smul.addr %s214, 128
          %s216 = scalar_lea.vmem [#allocation8], %s215
          %s218 = ssub.s32 2048, 2048
          %219 = vsyncadd %s213, %s218
          %s220 = smul.addr %s22, 32
          %s221 = smul.addr %s220, 64
          %s222 = scalar_lea.hbm %s2, %s221
          %s223 = sshll.u32 %s216, 4
          %s224 = int_to_ptr.vmem [resolvable:$true] %s223
          %229 = dma.hbm_to_vmem [thread:$0]  %s222, 2048, %s224, %s213, 64, 64, 4
        $region28: #{tpu_custom_call.1} parent=23 // pred_fallthru
          _
        // Predicated region
        $region29: #{tpu_custom_call.1} parent=23 // pred_check
          %p230 = pneg %p127
        $region30: #{tpu_custom_call.1} parent=23 // pred_check_branch
          %232 = sbr.rel (%p230) target = $region32
        $region31: #{tpu_custom_call.1} parent=23 // pred_region
          %p233 = scmp.lt.s32.totalorder %s22, 1
          %s234 = scalar_select %p233, %s22, 1
          %s235 = smul.addr %s234, 2
          %s236 = scalar_lea.vmem %s3, %s235
        $region32: #{tpu_custom_call.1} parent=23 // pred_fallthru
          _
      $region24: #{tpu_custom_call.1} parent=5 // pred_fallthru
        _
      %p237 = scmp.le.s32.totalorder 1, %s15
      %p238 = scmp.lt.s32.totalorder %s15, 5
      %p239 = pnand %p237, %p238
      %p240 = pneg %p239
      // Predicated region
      $region33: #{tpu_custom_call.1} parent=5 // pred_check
        _
      $region34: #{tpu_custom_call.1} parent=5 // pred_check_branch
        %242 = sbr.rel (%p239) target = $region36
      $region35: #{tpu_custom_call.1} parent=5 // pred_region
        %s243 = ssub.s32 %s15, 1
        // Predicated region
        $region37: #{tpu_custom_call.1} parent=35 // pred_check
          %p244 = pneg %p60
        $region38: #{tpu_custom_call.1} parent=35 // pred_check_branch
          %246 = sbr.rel (%p244) target = $region40
        $region39: #{tpu_custom_call.1} parent=35 // pred_region
          %247 = dma.done [#allocation4], 256
        $region40: #{tpu_custom_call.1} parent=35 // pred_fallthru
          _
        // Predicated region
        $region41: #{tpu_custom_call.1} parent=35 // pred_check
          %p248 = pneg %p81
        $region42: #{tpu_custom_call.1} parent=35 // pred_check_branch
          %250 = sbr.rel (%p248) target = $region44
        $region43: #{tpu_custom_call.1} parent=35 // pred_region
          %251 = dma.done [#allocation7], 256
        $region44: #{tpu_custom_call.1} parent=35 // pred_fallthru
          _
        %s252 = sand.u32 %s20, 1
        %s253 = scalar_lea.sflag [#allocation4], %s252
        %s254 = sand.u32 %s94, 1
        %s255 = smul.addr %s254, 128
        %s256 = scalar_lea.vmem [#allocation8], %s255
        // Predicated region
        $region45: #{tpu_custom_call.1} parent=35 // pred_check
          %p257 = pneg %p107
        $region46: #{tpu_custom_call.1} parent=35 // pred_check_branch
          %259 = sbr.rel (%p257) target = $region48
        $region47: #{tpu_custom_call.1} parent=35 // pred_region
          %260 = dma.done %s253, 2048
        $region48: #{tpu_custom_call.1} parent=35 // pred_fallthru
          _
        %p261 = pneg %p60
        %p262 = pneg %p57
        %p263 = pneg %p81
        %p264 = pneg %p78
        %s265 = sand.u32 %s20, 1
        %s266 = scalar_lea.sflag [#allocation4], %s265
        %s267 = sand.u32 %s94, 1
        %s268 = smul.addr %s267, 128
        %s269 = scalar_lea.vmem [#allocation8], %s268
        %p270 = pneg %p107
        %p271 = pneg %p104
        %p272 = scmp.lt.s32.totalorder %s25, 1
        %s273 = scalar_select %p272, %s25, 1
        %s274 = smul.addr %s273, 2
        %s275 = scalar_lea.vmem %s3, %s274
        %p276 = pneg %p133
        %p277 = pneg %p130
        %p278 = pneg %p161
        %p279 = pneg %p158
        %s280 = sand.u32 %s148, 1
        %s281 = scalar_lea.sflag [#allocation5], %s280
        %s282 = sand.u32 %s148, 1
        %s283 = smul.addr %s282, 16
        %s284 = scalar_lea.vmem [#allocation9], %s283
        %s285 = smul.u32 2, %s26
        %p286 = scmp.lt.s32.totalorder %s25, 1
        %s287 = scalar_select %p286, %s25, 1
        %s288 = smul.addr %s287, 2
        %s289 = scalar_lea.vmem %s3, %s288
        %s290 = smul.u32 2, %s26
        %p292 = scmp.eq.s32.totalorder %s27, 0
        // Predicated region
        $region49: #{tpu_custom_call.1} parent=35 // pred_check
          %p293 = pneg %p292
        $region50: #{tpu_custom_call.1} parent=35 // pred_check_branch
          %295 = sbr.rel (%p293) target = $region52
        $region51: #{tpu_custom_call.1} parent=35 // pred_region
          %v296 = vld [vmem:[#allocation3] sm:$0xff]
          %v297 = vld [vmem:[#allocation3 + $0x8] sm:$0xff]
          %v298 = vld [vmem:[#allocation6] sm:$0xff]
          %v299 = vld [vmem:[#allocation6 + $0x8] sm:$0xff]
          %v300 = vmul.f32 %v296, %v296
          %v301 = vmul.f32 %v297, %v297
          %vm302 = vcmask 130048
          %v304 = vsel %vm302, %v298, 0
          %v307 = vsel %vm302, %v299, 0
          %309 = vmatprep.subr.mxu0 0.0
          %v310 = vand.u32 %v300, 4294901760
          %311 = vmatpush1.msra.mxu0 %v310
          %312 = vmatprep.subr.mxu0 0.0
          %v313 = vand.u32 %v301, 4294901760
          %314 = vmatpush1.msra.mxu0 %v313
          %315 = vmatprep.subr.mxu0 0.0
          %316 = vmatpush1.msra.mxu0 0.0
          %317 = vmatprep.subr.mxu0 0.0
          %318 = vmatpush1.msra.mxu0 0.0
          %319 = vmatprep.subr.mxu0 0.0
          %320 = vmatpush1.msra.mxu0 0.0
          %321 = vmatprep.subr.mxu0 0.0
          %322 = vmatpush1.msra.mxu0 0.0
          %323 = vmatprep.subr.mxu0 0.0
          %324 = vmatpush1.msra.mxu0 0.0
          %325 = vmatprep.subr.mxu0 0.0
          %326 = vmatpush1.msra.mxu0 0.0
          %327 = vmatprep.subr.mxu0 0.0
          %328 = vmatpush1.msra.mxu0 0.0
          %329 = vmatprep.subr.mxu0 0.0
          %330 = vmatpush1.msra.mxu0 0.0
          %331 = vmatprep.subr.mxu0 0.0
          %332 = vmatpush1.msra.mxu0 0.0
          %333 = vmatprep.subr.mxu0 0.0
          %334 = vmatpush1.msra.mxu0 0.0
          %335 = vmatprep.subr.mxu0 0.0
          %336 = vmatpush1.msra.mxu0 0.0
          %337 = vmatprep.subr.mxu0 0.0
          %338 = vmatpush1.msra.mxu0 0.0
          %339 = vmatprep.subr.mxu0 0.0
          %340 = vmatpush1.msra.mxu0 0.0
          %341 = vmatprep.subr.mxu0 0.0
          %342 = vmatpush1.msra.mxu0 0.0
          %343 = vmatprep.subr.mxu0 0.0
          %344 = vmatpush1.msra.mxu0 0.0
          %345 = vmatprep.subr.mxu0 0.0
          %346 = vmatpush1.msra.mxu0 0.0
          %347 = vmatprep.subr.mxu0 0.0
          %348 = vmatpush1.msra.mxu0 0.0
          %349 = vmatprep.subr.mxu0 0.0
          %350 = vmatpush1.msra.mxu0 0.0
          %351 = vmatprep.subr.mxu0 0.0
          %352 = vmatpush1.msra.mxu0 0.0
          %353 = vmatprep.subr.mxu0 0.0
          %354 = vmatpush1.msra.mxu0 0.0
          %355 = vmatprep.subr.mxu0 0.0
          %356 = vmatpush1.msra.mxu0 0.0
          %357 = vmatprep.subr.mxu0 0.0
          %358 = vmatpush1.msra.mxu0 0.0
          %359 = vmatprep.subr.mxu0 0.0
          %360 = vmatpush1.msra.mxu0 0.0
          %361 = vmatprep.subr.mxu0 0.0
          %362 = vmatpush1.msra.mxu0 0.0
          %363 = vmatprep.subr.mxu0 0.0
          %364 = vmatpush1.msra.mxu0 0.0
          %365 = vmatprep.subr.mxu0 0.0
          %366 = vmatpush1.msra.mxu0 0.0
          %367 = vmatprep.subr.mxu0 0.0
          %368 = vmatpush1.msra.mxu0 0.0
          %369 = vmatprep.subr.mxu0 0.0
          %370 = vmatpush1.msra.mxu0 0.0
          %371 = vmatprep.subr.mxu0 0.0
          %372 = vmatpush1.msra.mxu0 0.0
          %373 = vmatprep.subr.mxu0 0.0
          %374 = vmatpush1.msra.mxu0 0.0
          %375 = vmatprep.mubr.f32.mxu0 0.0
          %v376 = vand.u32 %v304, 4294901760
          %v377 = vsub.f32 %v304, %v376
          %v378 = vand.u32 %v377, 4294901760
          %v379 = vsub.f32 %v377, %v378
          %v380 = vand.u32 %v379, 4294901760
          %381 = vmatmul.mubr.f32.gmra.mrb[0].mxu0 %v380
          %v382 = vpop.f32.mrb[0].mxu0
          %v383 = vadd.f32 0.0, %v382
          %v384 = vpop.f32.mrb[0].mxu0
          %385 = vmatprep.mubr.f32.mxu0 0.0
          %v386 = vand.u32 %v307, 4294901760
          %v387 = vsub.f32 %v307, %v386
          %v388 = vand.u32 %v387, 4294901760
          %v389 = vsub.f32 %v387, %v388
          %v390 = vand.u32 %v389, 4294901760
          %391 = vmatmul.mubr.f32.gmra.mrb[0].mxu0 %v390
          %v392 = vpop.f32.mrb[0].mxu0
          %v393 = vadd.f32 0.0, %v392
          %v394 = vpop.f32.mrb[0].mxu0
          %395 = vdwg.mxu0
          %396 = vmatprep.subr.mxu0 0.0
          %v397 = vand.u32 %v300, 4294901760
          %v398 = vsub.f32 %v300, %v397
          %v399 = vand.u32 %v398, 4294901760
          %v400 = vsub.f32 %v398, %v399
          %v401 = vand.u32 %v400, 4294901760
          %402 = vmatpush1.msra.mxu0 %v401
          %403 = vmatprep.subr.mxu0 0.0
          %v404 = vand.u32 %v301, 4294901760
          %v405 = vsub.f32 %v301, %v404
          %v406 = vand.u32 %v405, 4294901760
          %v407 = vsub.f32 %v405, %v406
          %v408 = vand.u32 %v407, 4294901760
          %409 = vmatpush1.msra.mxu0 %v408
          %410 = vmatprep.subr.mxu0 0.0
          %411 = vmatpush1.msra.mxu0 0.0
          %412 = vmatprep.subr.mxu0 0.0
          %413 = vmatpush1.msra.mxu0 0.0
          %414 = vmatprep.subr.mxu0 0.0
          %415 = vmatpush1.msra.mxu0 0.0
          %416 = vmatprep.subr.mxu0 0.0
          %417 = vmatpush1.msra.mxu0 0.0
          %418 = vmatprep.subr.mxu0 0.0
          %419 = vmatpush1.msra.mxu0 0.0
          %420 = vmatprep.subr.mxu0 0.0
          %421 = vmatpush1.msra.mxu0 0.0
          %422 = vmatprep.subr.mxu0 0.0
          %423 = vmatpush1.msra.mxu0 0.0
          %424 = vmatprep.subr.mxu0 0.0
          %425 = vmatpush1.msra.mxu0 0.0
          %426 = vmatprep.subr.mxu0 0.0
          %427 = vmatpush1.msra.mxu0 0.0
          %428 = vmatprep.subr.mxu0 0.0
          %429 = vmatpush1.msra.mxu0 0.0
          %430 = vmatprep.subr.mxu0 0.0
          %431 = vmatpush1.msra.mxu0 0.0
          %432 = vmatprep.subr.mxu0 0.0
          %433 = vmatpush1.msra.mxu0 0.0
          %434 = vmatprep.subr.mxu0 0.0
          %435 = vmatpush1.msra.mxu0 0.0
          %436 = vmatprep.subr.mxu0 0.0
          %437 = vmatpush1.msra.mxu0 0.0
          %438 = vmatprep.subr.mxu0 0.0
          %439 = vmatpush1.msra.mxu0 0.0
          %440 = vmatprep.subr.mxu0 0.0
          %441 = vmatpush1.msra.mxu0 0.0
          %442 = vmatprep.subr.mxu0 0.0
          %443 = vmatpush1.msra.mxu0 0.0
          %444 = vmatprep.subr.mxu0 0.0
          %445 = vmatpush1.msra.mxu0 0.0
          %446 = vmatprep.subr.mxu0 0.0
          %447 = vmatpush1.msra.mxu0 0.0
          %448 = vmatprep.subr.mxu0 0.0
          %449 = vmatpush1.msra.mxu0 0.0
          %450 = vmatprep.subr.mxu0 0.0
          %451 = vmatpush1.msra.mxu0 0.0
          %452 = vmatprep.subr.mxu0 0.0
          %453 = vmatpush1.msra.mxu0 0.0
          %454 = vmatprep.subr.mxu0 0.0
          %455 = vmatpush1.msra.mxu0 0.0
          %456 = vmatprep.subr.mxu0 0.0
          %457 = vmatpush1.msra.mxu0 0.0
          %458 = vmatprep.subr.mxu0 0.0
          %459 = vmatpush1.msra.mxu0 0.0
          %460 = vmatprep.subr.mxu0 0.0
          %461 = vmatpush1.msra.mxu0 0.0
          %462 = vmatprep.subr.mxu0 0.0
          %463 = vmatpush1.msra.mxu0 0.0
          %464 = vmatprep.subr.mxu0 0.0
          %465 = vmatpush1.msra.mxu0 0.0
          %466 = vmatprep.subr.mxu0 0.0
          %467 = vmatpush1.msra.mxu0 0.0
          %468 = vmatprep.subr.mxu0 0.0
          %469 = vmatpush1.msra.mxu0 0.0
          %470 = vmatprep.mubr.f32.mxu0 0.0
          %v471 = vand.u32 %v304, 4294901760
          %472 = vmatmul.mubr.f32.gmra.mrb[0].mxu0 %v471
          %v473 = vpop.f32.mrb[0].mxu0
          %v474 = vadd.f32 %v383, %v473
          %v475 = vpop.f32.mrb[0].mxu0
          %476 = vmatprep.mubr.f32.mxu0 0.0
          %v477 = vand.u32 %v307, 4294901760
          %478 = vmatmul.mubr.f32.gmra.mrb[0].mxu0 %v477
          %v479 = vpop.f32.mrb[0].mxu0
          %v480 = vadd.f32 %v393, %v479
          %v481 = vpop.f32.mrb[0].mxu0
          %482 = vdwg.mxu0
          %483 = vmatprep.subr.mxu0 0.0
          %v484 = vand.u32 %v300, 4294901760
          %v485 = vsub.f32 %v300, %v484
          %486 = vmatpush1.msra.mxu0 %v485
          %487 = vmatprep.subr.mxu0 0.0
          %v488 = vand.u32 %v301, 4294901760
          %v489 = vsub.f32 %v301, %v488
          %490 = vmatpush1.msra.mxu0 %v489
          %491 = vmatprep.subr.mxu0 0.0
          %492 = vmatpush1.msra.mxu0 0.0
          %493 = vmatprep.subr.mxu0 0.0
          %494 = vmatpush1.msra.mxu0 0.0
          %495 = vmatprep.subr.mxu0 0.0
          %496 = vmatpush1.msra.mxu0 0.0
          %497 = vmatprep.subr.mxu0 0.0
          %498 = vmatpush1.msra.mxu0 0.0
          %499 = vmatprep.subr.mxu0 0.0
          %500 = vmatpush1.msra.mxu0 0.0
          %501 = vmatprep.subr.mxu0 0.0
          %502 = vmatpush1.msra.mxu0 0.0
          %503 = vmatprep.subr.mxu0 0.0
          %504 = vmatpush1.msra.mxu0 0.0
          %505 = vmatprep.subr.mxu0 0.0
          %506 = vmatpush1.msra.mxu0 0.0
          %507 = vmatprep.subr.mxu0 0.0
          %508 = vmatpush1.msra.mxu0 0.0
          %509 = vmatprep.subr.mxu0 0.0
          %510 = vmatpush1.msra.mxu0 0.0
          %511 = vmatprep.subr.mxu0 0.0
          %512 = vmatpush1.msra.mxu0 0.0
          %513 = vmatprep.subr.mxu0 0.0
          %514 = vmatpush1.msra.mxu0 0.0
          %515 = vmatprep.subr.mxu0 0.0
          %516 = vmatpush1.msra.mxu0 0.0
          %517 = vmatprep.subr.mxu0 0.0
          %518 = vmatpush1.msra.mxu0 0.0
          %519 = vmatprep.subr.mxu0 0.0
          %520 = vmatpush1.msra.mxu0 0.0
          %521 = vmatprep.subr.mxu0 0.0
          %522 = vmatpush1.msra.mxu0 0.0
          %523 = vmatprep.subr.mxu0 0.0
          %524 = vmatpush1.msra.mxu0 0.0
          %525 = vmatprep.subr.mxu0 0.0
          %526 = vmatpush1.msra.mxu0 0.0
          %527 = vmatprep.subr.mxu0 0.0
          %528 = vmatpush1.msra.mxu0 0.0
          %529 = vmatprep.subr.mxu0 0.0
          %530 = vmatpush1.msra.mxu0 0.0
          %531 = vmatprep.subr.mxu0 0.0
          %532 = vmatpush1.msra.mxu0 0.0
          %533 = vmatprep.subr.mxu0 0.0
          %534 = vmatpush1.msra.mxu0 0.0
          %535 = vmatprep.subr.mxu0 0.0
          %536 = vmatpush1.msra.mxu0 0.0
          %537 = vmatprep.subr.mxu0 0.0
          %538 = vmatpush1.msra.mxu0 0.0
          %539 = vmatprep.subr.mxu0 0.0
          %540 = vmatpush1.msra.mxu0 0.0
          %541 = vmatprep.subr.mxu0 0.0
          %542 = vmatpush1.msra.mxu0 0.0
          %543 = vmatprep.subr.mxu0 0.0
          %544 = vmatpush1.msra.mxu0 0.0
          %545 = vmatprep.subr.mxu0 0.0
          %546 = vmatpush1.msra.mxu0 0.0
          %547 = vmatprep.subr.mxu0 0.0
          %548 = vmatpush1.msra.mxu0 0.0
          %549 = vmatprep.subr.mxu0 0.0
          %550 = vmatpush1.msra.mxu0 0.0
          %551 = vmatprep.mubr.f32.mxu0 0.0
          %v552 = vand.u32 %v304, 4294901760
          %v553 = vsub.f32 %v304, %v552
          %554 = vmatmul.mubr.f32.gmra.mrb[0].mxu0 %v553
          %v555 = vpop.f32.mrb[0].mxu0
          %v556 = vadd.f32 %v474, %v555
          %v557 = vpop.f32.mrb[0].mxu0
          %558 = vmatprep.mubr.f32.mxu0 0.0
          %v559 = vand.u32 %v307, 4294901760
          %v560 = vsub.f32 %v307, %v559
          %561 = vmatmul.mubr.f32.gmra.mrb[0].mxu0 %v560
          %v562 = vpop.f32.mrb[0].mxu0
          %v563 = vadd.f32 %v480, %v562
          %v564 = vpop.f32.mrb[0].mxu0
          %565 = vdwg.mxu0
          %566 = vmatprep.subr.mxu0 0.0
          %v567 = vand.u32 %v300, 4294901760
          %568 = vmatpush1.msra.mxu0 %v567
          %569 = vmatprep.subr.mxu0 0.0
          %v570 = vand.u32 %v301, 4294901760
          %571 = vmatpush1.msra.mxu0 %v570
          %572 = vmatprep.subr.mxu0 0.0
          %573 = vmatpush1.msra.mxu0 0.0
          %574 = vmatprep.subr.mxu0 0.0
          %575 = vmatpush1.msra.mxu0 0.0
          %576 = vmatprep.subr.mxu0 0.0
          %577 = vmatpush1.msra.mxu0 0.0
          %578 = vmatprep.subr.mxu0 0.0
          %579 = vmatpush1.msra.mxu0 0.0
          %580 = vmatprep.subr.mxu0 0.0
          %581 = vmatpush1.msra.mxu0 0.0
          %582 = vmatprep.subr.mxu0 0.0
          %583 = vmatpush1.msra.mxu0 0.0
          %584 = vmatprep.subr.mxu0 0.0
          %585 = vmatpush1.msra.mxu0 0.0
          %586 = vmatprep.subr.mxu0 0.0
          %587 = vmatpush1.msra.mxu0 0.0
          %588 = vmatprep.subr.mxu0 0.0
          %589 = vmatpush1.msra.mxu0 0.0
          %590 = vmatprep.subr.mxu0 0.0
          %591 = vmatpush1.msra.mxu0 0.0
          %592 = vmatprep.subr.mxu0 0.0
          %593 = vmatpush1.msra.mxu0 0.0
          %594 = vmatprep.subr.mxu0 0.0
          %595 = vmatpush1.msra.mxu0 0.0
          %596 = vmatprep.subr.mxu0 0.0
          %597 = vmatpush1.msra.mxu0 0.0
          %598 = vmatprep.subr.mxu0 0.0
          %599 = vmatpush1.msra.mxu0 0.0
          %600 = vmatprep.subr.mxu0 0.0
          %601 = vmatpush1.msra.mxu0 0.0
          %602 = vmatprep.subr.mxu0 0.0
          %603 = vmatpush1.msra.mxu0 0.0
          %604 = vmatprep.subr.mxu0 0.0
          %605 = vmatpush1.msra.mxu0 0.0
          %606 = vmatprep.subr.mxu0 0.0
          %607 = vmatpush1.msra.mxu0 0.0
          %608 = vmatprep.subr.mxu0 0.0
          %609 = vmatpush1.msra.mxu0 0.0
          %610 = vmatprep.subr.mxu0 0.0
          %611 = vmatpush1.msra.mxu0 0.0
          %612 = vmatprep.subr.mxu0 0.0
          %613 = vmatpush1.msra.mxu0 0.0
          %614 = vmatprep.subr.mxu0 0.0
          %615 = vmatpush1.msra.mxu0 0.0
          %616 = vmatprep.subr.mxu0 0.0
          %617 = vmatpush1.msra.mxu0 0.0
          %618 = vmatprep.subr.mxu0 0.0
          %619 = vmatpush1.msra.mxu0 0.0
          %620 = vmatprep.subr.mxu0 0.0
          %621 = vmatpush1.msra.mxu0 0.0
          %622 = vmatprep.subr.mxu0 0.0
          %623 = vmatpush1.msra.mxu0 0.0
          %624 = vmatprep.subr.mxu0 0.0
          %625 = vmatpush1.msra.mxu0 0.0
          %626 = vmatprep.subr.mxu0 0.0
          %627 = vmatpush1.msra.mxu0 0.0
          %628 = vmatprep.subr.mxu0 0.0
          %629 = vmatpush1.msra.mxu0 0.0
          %630 = vmatprep.subr.mxu0 0.0
          %631 = vmatpush1.msra.mxu0 0.0
          %632 = vmatprep.mubr.f32.mxu0 0.0
          %v633 = vand.u32 %v304, 4294901760
          %v634 = vsub.f32 %v304, %v633
          %v635 = vand.u32 %v634, 4294901760
          %636 = vmatmul.mubr.f32.gmra.mrb[0].mxu0 %v635
          %v637 = vpop.f32.mrb[0].mxu0
          %v638 = vadd.f32 %v556, %v637
          %v639 = vpop.f32.mrb[0].mxu0
          %640 = vmatprep.mubr.f32.mxu0 0.0
          %v641 = vand.u32 %v307, 4294901760
          %v642 = vsub.f32 %v307, %v641
          %v643 = vand.u32 %v642, 4294901760
          %644 = vmatmul.mubr.f32.gmra.mrb[0].mxu0 %v643
          %v645 = vpop.f32.mrb[0].mxu0
          %v646 = vadd.f32 %v563, %v645
          %v647 = vpop.f32.mrb[0].mxu0
          %648 = vdwg.mxu0
          %649 = vmatprep.subr.mxu0 0.0
          %v650 = vand.u32 %v300, 4294901760
          %v651 = vsub.f32 %v300, %v650
          %v652 = vand.u32 %v651, 4294901760
          %653 = vmatpush1.msra.mxu0 %v652
          %654 = vmatprep.subr.mxu0 0.0
          %v655 = vand.u32 %v301, 4294901760
          %v656 = vsub.f32 %v301, %v655
          %v657 = vand.u32 %v656, 4294901760
          %658 = vmatpush1.msra.mxu0 %v657
          %659 = vmatprep.subr.mxu0 0.0
          %660 = vmatpush1.msra.mxu0 0.0
          %661 = vmatprep.subr.mxu0 0.0
          %662 = vmatpush1.msra.mxu0 0.0
          %663 = vmatprep.subr.mxu0 0.0
          %664 = vmatpush1.msra.mxu0 0.0
          %665 = vmatprep.subr.mxu0 0.0
          %666 = vmatpush1.msra.mxu0 0.0
          %667 = vmatprep.subr.mxu0 0.0
          %668 = vmatpush1.msra.mxu0 0.0
          %669 = vmatprep.subr.mxu0 0.0
          %670 = vmatpush1.msra.mxu0 0.0
          %671 = vmatprep.subr.mxu0 0.0
          %672 = vmatpush1.msra.mxu0 0.0
          %673 = vmatprep.subr.mxu0 0.0
          %674 = vmatpush1.msra.mxu0 0.0
          %675 = vmatprep.subr.mxu0 0.0
          %676 = vmatpush1.msra.mxu0 0.0
          %677 = vmatprep.subr.mxu0 0.0
          %678 = vmatpush1.msra.mxu0 0.0
          %679 = vmatprep.subr.mxu0 0.0
          %680 = vmatpush1.msra.mxu0 0.0
          %681 = vmatprep.subr.mxu0 0.0
          %682 = vmatpush1.msra.mxu0 0.0
          %683 = vmatprep.subr.mxu0 0.0
          %684 = vmatpush1.msra.mxu0 0.0
          %685 = vmatprep.subr.mxu0 0.0
          %686 = vmatpush1.msra.mxu0 0.0
          %687 = vmatprep.subr.mxu0 0.0
          %688 = vmatpush1.msra.mxu0 0.0
          %689 = vmatprep.subr.mxu0 0.0
          %690 = vmatpush1.msra.mxu0 0.0
          %691 = vmatprep.subr.mxu0 0.0
          %692 = vmatpush1.msra.mxu0 0.0
          %693 = vmatprep.subr.mxu0 0.0
          %694 = vmatpush1.msra.mxu0 0.0
          %695 = vmatprep.subr.mxu0 0.0
          %696 = vmatpush1.msra.mxu0 0.0
          %697 = vmatprep.subr.mxu0 0.0
          %698 = vmatpush1.msra.mxu0 0.0
          %699 = vmatprep.subr.mxu0 0.0
          %700 = vmatpush1.msra.mxu0 0.0
          %701 = vmatprep.subr.mxu0 0.0
          %702 = vmatpush1.msra.mxu0 0.0
          %703 = vmatprep.subr.mxu0 0.0
          %704 = vmatpush1.msra.mxu0 0.0
          %705 = vmatprep.subr.mxu0 0.0
          %706 = vmatpush1.msra.mxu0 0.0
          %707 = vmatprep.subr.mxu0 0.0
          %708 = vmatpush1.msra.mxu0 0.0
          %709 = vmatprep.subr.mxu0 0.0
          %710 = vmatpush1.msra.mxu0 0.0
          %711 = vmatprep.subr.mxu0 0.0
          %712 = vmatpush1.msra.mxu0 0.0
          %713 = vmatprep.subr.mxu0 0.0
          %714 = vmatpush1.msra.mxu0 0.0
          %715 = vmatprep.subr.mxu0 0.0
          %716 = vmatpush1.msra.mxu0 0.0
          %717 = vmatprep.subr.mxu0 0.0
          %718 = vmatpush1.msra.mxu0 0.0
          %719 = vmatprep.mubr.f32.mxu0 0.0
          %v720 = vand.u32 %v304, 4294901760
          %721 = vmatmul.mubr.f32.gmra.mrb[0].mxu0 %v720
          %v722 = vpop.f32.mrb[0].mxu0
          %v723 = vadd.f32 %v638, %v722
          %v724 = vpop.f32.mrb[0].mxu0
          %725 = vmatprep.mubr.f32.mxu0 0.0
          %v726 = vand.u32 %v307, 4294901760
          %727 = vmatmul.mubr.f32.gmra.mrb[0].mxu0 %v726
          %v728 = vpop.f32.mrb[0].mxu0
          %v729 = vadd.f32 %v646, %v728
          %v730 = vpop.f32.mrb[0].mxu0
          %731 = vdwg.mxu0
          %732 = vmatprep.subr.mxu0 0.0
          %v733 = vand.u32 %v300, 4294901760
          %734 = vmatpush1.msra.mxu0 %v733
          %735 = vmatprep.subr.mxu0 0.0
          %v736 = vand.u32 %v301, 4294901760
          %737 = vmatpush1.msra.mxu0 %v736
          %738 = vmatprep.subr.mxu0 0.0
          %739 = vmatpush1.msra.mxu0 0.0
          %740 = vmatprep.subr.mxu0 0.0
          %741 = vmatpush1.msra.mxu0 0.0
          %742 = vmatprep.subr.mxu0 0.0
          %743 = vmatpush1.msra.mxu0 0.0
          %744 = vmatprep.subr.mxu0 0.0
          %745 = vmatpush1.msra.mxu0 0.0
          %746 = vmatprep.subr.mxu0 0.0
          %747 = vmatpush1.msra.mxu0 0.0
          %748 = vmatprep.subr.mxu0 0.0
          %749 = vmatpush1.msra.mxu0 0.0
          %750 = vmatprep.subr.mxu0 0.0
          %751 = vmatpush1.msra.mxu0 0.0
          %752 = vmatprep.subr.mxu0 0.0
          %753 = vmatpush1.msra.mxu0 0.0
          %754 = vmatprep.subr.mxu0 0.0
          %755 = vmatpush1.msra.mxu0 0.0
          %756 = vmatprep.subr.mxu0 0.0
          %757 = vmatpush1.msra.mxu0 0.0
          %758 = vmatprep.subr.mxu0 0.0
          %759 = vmatpush1.msra.mxu0 0.0
          %760 = vmatprep.subr.mxu0 0.0
          %761 = vmatpush1.msra.mxu0 0.0
          %762 = vmatprep.subr.mxu0 0.0
          %763 = vmatpush1.msra.mxu0 0.0
          %764 = vmatprep.subr.mxu0 0.0
          %765 = vmatpush1.msra.mxu0 0.0
          %766 = vmatprep.subr.mxu0 0.0
          %767 = vmatpush1.msra.mxu0 0.0
          %768 = vmatprep.subr.mxu0 0.0
          %769 = vmatpush1.msra.mxu0 0.0
          %770 = vmatprep.subr.mxu0 0.0
          %771 = vmatpush1.msra.mxu0 0.0
          %772 = vmatprep.subr.mxu0 0.0
          %773 = vmatpush1.msra.mxu0 0.0
          %774 = vmatprep.subr.mxu0 0.0
          %775 = vmatpush1.msra.mxu0 0.0
          %776 = vmatprep.subr.mxu0 0.0
          %777 = vmatpush1.msra.mxu0 0.0
          %778 = vmatprep.subr.mxu0 0.0
          %779 = vmatpush1.msra.mxu0 0.0
          %780 = vmatprep.subr.mxu0 0.0
          %781 = vmatpush1.msra.mxu0 0.0
          %782 = vmatprep.subr.mxu0 0.0
          %783 = vmatpush1.msra.mxu0 0.0
          %784 = vmatprep.subr.mxu0 0.0
          %785 = vmatpush1.msra.mxu0 0.0
          %786 = vmatprep.subr.mxu0 0.0
          %787 = vmatpush1.msra.mxu0 0.0
          %788 = vmatprep.subr.mxu0 0.0
          %789 = vmatpush1.msra.mxu0 0.0
          %790 = vmatprep.subr.mxu0 0.0
          %791 = vmatpush1.msra.mxu0 0.0
          %792 = vmatprep.subr.mxu0 0.0
          %793 = vmatpush1.msra.mxu0 0.0
          %794 = vmatprep.subr.mxu0 0.0
          %795 = vmatpush1.msra.mxu0 0.0
          %796 = vmatprep.subr.mxu0 0.0
          %797 = vmatpush1.msra.mxu0 0.0
          %798 = vmatprep.mubr.f32.mxu0 0.0
          %v799 = vand.u32 %v304, 4294901760
          %800 = vmatmul.mubr.f32.gmra.mrb[0].mxu0 %v799
          %v801 = vpop.f32.mrb[0].mxu0
          %v802 = vadd.f32 %v723, %v801
          %v803 = vpop.f32.mrb[0].mxu0
          %804 = vmatprep.mubr.f32.mxu0 0.0
          %v805 = vand.u32 %v307, 4294901760
          %806 = vmatmul.mubr.f32.gmra.mrb[0].mxu0 %v805
          %v807 = vpop.f32.mrb[0].mxu0
          %v808 = vadd.f32 %v729, %v807
          %v809 = vpop.f32.mrb[0].mxu0
          %810 = vdwg.mxu0
          %v811 = vrsqrt.pop %v802
          %v812 = vmul.f32 %v802, %v811
          %vm813 = vcmp.eq.f32.partialorder %v802, inf
          %v814 = vsel %vm813, %v802, %v812
          %vm815 = vcmp.eq.f32.partialorder %v802, 0.0
          %v816 = vand.u32 %v802, 2147483648
          %v817 = vsel %vm815, %v816, %v814
          %v818 = vrsqrt.pop %v808
          %v819 = vmul.f32 %v808, %v818
          %vm820 = vcmp.eq.f32.partialorder %v808, inf
          %v821 = vsel %vm820, %v808, %v819
          %vm822 = vcmp.eq.f32.partialorder %v808, 0.0
          %v823 = vand.u32 %v808, 2147483648
          %v824 = vsel %vm822, %v823, %v821
          %v825 = vmax.f32 %v817, 1e-12
          %v826 = vmax.f32 %v824, 1e-12
          %v827 = vrcp.pop %v825
          %v828 = vmul.f32 %v296, %v827
          %v829 = vrcp.pop %v826
          %v830 = vmul.f32 %v297, %v829
          %831 = vst [vmem:[#allocation2] sm:$0xff] %v828
          %832 = vst [vmem:[#allocation2 + $0x8] sm:$0xff] %v830
        $region52: #{tpu_custom_call.1} parent=35 // pred_fallthru
          _
        %v833 = vld [vmem:[#allocation2] sm:$0xff]
        %v834 = vld [vmem:[#allocation2 + $0x8] sm:$0xff]
        %s835 = smul.u32 %s27, 16
        %s836 = smul.addr %s835, 4
        %s837 = scalar_lea.vmem %s256, %s836 [#allocation8]
        %v838 = vld [vmem:[%s837] sm:$0xf]
        %v839 = vld [vmem:[%s837 + $0x4] sm:$0xf]
        %v840 = vld [vmem:[%s837 + $0x8] sm:$0xf]
        %v841 = vld [vmem:[%s837 + $0xc] sm:$0xf]
        %v842 = vld [vmem:[%s837 + $0x10] sm:$0xf]
        %v843 = vld [vmem:[%s837 + $0x14] sm:$0xf]
        %v844 = vld [vmem:[%s837 + $0x18] sm:$0xf]
        %v845 = vld [vmem:[%s837 + $0x1c] sm:$0xf]
        %v846 = vld [vmem:[%s837 + $0x20] sm:$0xf]
        %v847 = vld [vmem:[%s837 + $0x24] sm:$0xf]
        %v848 = vld [vmem:[%s837 + $0x28] sm:$0xf]
        %v849 = vld [vmem:[%s837 + $0x2c] sm:$0xf]
        %v850 = vld [vmem:[%s837 + $0x30] sm:$0xf]
        %v851 = vld [vmem:[%s837 + $0x34] sm:$0xf]
        %v852 = vld [vmem:[%s837 + $0x38] sm:$0xf]
        %v853 = vld [vmem:[%s837 + $0x3c] sm:$0xf]
        %v854 = vpack.c.bf16 %v834, %v833
        %s855 = scalar_lea.vmem %s289, %s27
        %v856 = vld [vmem:[%s855] sm:$0x1]
        %v858 = vlaneseq
        %v859 = vshrl.u32 %v858, 7
        %v860 = vsub.s32 0, %v859
        %v861 = vrot.slane %v856, %v860
        %v879 = vunpack.c.l.b16 %v838
        %v880 = vunpack.c.l.b16 %v839
        %v881 = vunpack.c.l.b16 %v840
        %v882 = vunpack.c.l.b16 %v841
        %v883 = vunpack.c.l.b16 %v842
        %v884 = vunpack.c.l.b16 %v843
        %v885 = vunpack.c.l.b16 %v844
        %v886 = vunpack.c.l.b16 %v845
        %v887 = vunpack.c.l.b16 %v846
        %v888 = vunpack.c.l.b16 %v847
        %v889 = vunpack.c.l.b16 %v848
        %v890 = vunpack.c.l.b16 %v849
        %v891 = vunpack.c.l.b16 %v850
        %v892 = vunpack.c.l.b16 %v851
        %v893 = vunpack.c.l.b16 %v852
        %v894 = vunpack.c.l.b16 %v853
        %v895 = vpack.c.b16 %v880, %v879
        %v896 = vpack.c.b16 %v882, %v881
        %v897 = vpack.c.b16 %v884, %v883
        %v898 = vpack.c.b16 %v886, %v885
        %v899 = vpack.c.b16 %v888, %v887
        %v900 = vpack.c.b16 %v890, %v889
        %v901 = vpack.c.b16 %v892, %v891
        %v902 = vpack.c.b16 %v894, %v893
        %911 = vmatprep.subr.bf16.mxu0 0
        %912 = vmatpush1.bf16.msra.mxu0 %v895
        %913 = vmatprep.subr.bf16.mxu0 0
        %914 = vmatpush1.bf16.msra.mxu0 %v896
        %915 = vmatprep.subr.bf16.mxu0 0
        %916 = vmatpush1.bf16.msra.mxu0 %v897
        %917 = vmatprep.subr.bf16.mxu0 0
        %918 = vmatpush1.bf16.msra.mxu0 %v898
        %919 = vmatprep.subr.bf16.mxu0 0
        %920 = vmatpush1.bf16.msra.mxu0 %v899
        %921 = vmatprep.subr.bf16.mxu0 0
        %922 = vmatpush1.bf16.msra.mxu0 %v900
        %923 = vmatprep.subr.bf16.mxu0 0
        %924 = vmatpush1.bf16.msra.mxu0 %v901
        %925 = vmatprep.subr.bf16.mxu0 0
        %926 = vmatpush1.bf16.msra.mxu0 %v902
        %927 = vmatprep.subr.bf16.mxu0 0
        %928 = vmatpush1.bf16.msra.mxu0 0
        %929 = vmatprep.subr.bf16.mxu0 0
        %930 = vmatpush1.bf16.msra.mxu0 0
        %931 = vmatprep.subr.bf16.mxu0 0
        %932 = vmatpush1.bf16.msra.mxu0 0
        %933 = vmatprep.subr.bf16.mxu0 0
        %934 = vmatpush1.bf16.msra.mxu0 0
        %935 = vmatprep.subr.bf16.mxu0 0
        %936 = vmatpush1.bf16.msra.mxu0 0
        %937 = vmatprep.subr.bf16.mxu0 0
        %938 = vmatpush1.bf16.msra.mxu0 0
        %939 = vmatprep.subr.bf16.mxu0 0
        %940 = vmatpush1.bf16.msra.mxu0 0
        %941 = vmatprep.subr.bf16.mxu0 0
        %942 = vmatpush1.bf16.msra.mxu0 0
        %943 = vmatprep.mubr.bf16.mxu0 0
        %944 = vmatmul.mubr.bf16.gmra.mrb[0].mxu0 %v854
        %v945 = vpop.f32.mrb[0].mxu0
        %v946 = vadd.f32 %v861, %v945
        %v947 = vpop.f32.mrb[0].mxu0
        %v948 = vpop.f32.mrb[0].mxu0
        %v949 = vadd.f32 %v861, %v948
        %v950 = vpop.f32.mrb[0].mxu0
        %951 = vdwg.mxu0
        %vm952 = vcmp.ge.f32.partialorder %v946, 0.0
        %vm953 = vcmp.ge.f32.partialorder %v949, 0.0
        %v954 = vmul.f32 %v946, 0.2
        %v955 = vmul.f32 %v949, 0.2
        %v956 = vsel %vm952, %v946, %v954
        %v957 = vsel %vm953, %v949, %v955
        %958 = vst [vmem:[#allocation2] sm:$0xff] %v956
        %959 = vst [vmem:[#allocation2 + $0x8] sm:$0xff] %v957
        %p960 = scmp.eq.s32.totalorder %s27, 1
        // Predicated region
        $region53: #{tpu_custom_call.1} parent=35 // pred_check
          %p961 = pneg %p960
        $region54: #{tpu_custom_call.1} parent=35 // pred_check_branch
          %963 = sbr.rel (%p961) target = $region56
        $region55: #{tpu_custom_call.1} parent=35 // pred_region
          %964 = vst [vmem:[%s284] sm:$0xff] %v956
          %965 = vst [vmem:[%s284 + $0x8] sm:$0xff] %v957
        $region56: #{tpu_custom_call.1} parent=35 // pred_fallthru
          _
        %s966 = sand.u32 %s148, 1
        %s967 = scalar_lea.sflag [#allocation5], %s966
        %s968 = sand.u32 %s148, 1
        %s969 = smul.addr %s968, 16
        %s970 = scalar_lea.vmem [#allocation9], %s969
        // Predicated region
        $region57: #{tpu_custom_call.1} parent=35 // pred_check
          %p971 = pneg %p158
        $region58: #{tpu_custom_call.1} parent=35 // pred_check_branch
          %973 = sbr.rel (%p971) target = $region60
        $region59: #{tpu_custom_call.1} parent=35 // pred_region
          %s974 = smul.u32 2, %s26
          %s976 = ssub.s32 256, 256
          %977 = vsyncadd %s967, %s976
          %s978 = smul.addr %s25, 2
          %s979 = sadd.s32 %s974, %s978
          %s980 = smul.addr %s979, 128
          %s981 = scalar_lea.hbm %s4, %s980
          %s982 = sshll.u32 %s970, 4
          %s983 = int_to_ptr.vmem [resolvable:$true] %s982
          %988 = dma.vmem_to_hbm [thread:$0]  %s983, 256, %s981, %s967, 128, 128, 8
        $region60: #{tpu_custom_call.1} parent=35 // pred_fallthru
          _
      $region36: #{tpu_custom_call.1} parent=5 // pred_fallthru
        _
      %p989 = scmp.le.s32.totalorder 2, %s15
      // Predicated region
      $region61: #{tpu_custom_call.1} parent=5 // pred_check
        %p990 = pneg %p989
      $region62: #{tpu_custom_call.1} parent=5 // pred_check_branch
        %992 = sbr.rel (%p990) target = $region64
      $region63: #{tpu_custom_call.1} parent=5 // pred_region
        %s993 = ssub.s32 %s15, 2
        // Predicated region
        $region65: #{tpu_custom_call.1} parent=63 // pred_check
          %p994 = pneg %p164
        $region66: #{tpu_custom_call.1} parent=63 // pred_check_branch
          %996 = sbr.rel (%p994) target = $region68
        $region67: #{tpu_custom_call.1} parent=63 // pred_region
          %s997 = sand.u32 %s149, 1
          %s998 = scalar_lea.sflag [#allocation5], %s997
          %s999 = sand.u32 %s149, 1
          %s1000 = smul.addr %s999, 16
          %s1001 = scalar_lea.vmem [#allocation9], %s1000
          %1002 = dma.done %s998, 256
        $region68: #{tpu_custom_call.1} parent=63 // pred_fallthru
          _
      $region64: #{tpu_custom_call.1} parent=5 // pred_fallthru
        _
    $region6: #{tpu_custom_call.1} parent=1 // loop_footer
      %s19 = sadd.s32 1, %s15
    $region7: #{tpu_custom_call.1} parent=1 // loop_footer_branch
      %14 = sbr.rel target = $region3
    $region8: #{tpu_custom_call.1} parent=1 // loop_exit
      _
    %1003 = vsyncpa [#allocation4], 1
    %s1004 = scalar_lea.sflag [#allocation4], 1
    %1005 = vsyncpa %s1004, 1
    %1006 = vsyncpa [#allocation7], 1
    %1007 = vsyncpa [#allocation5], 1
    %s1008 = scalar_lea.sflag [#allocation5], 1
    %1009 = vsyncpa %s1008, 1

</llo_original>
